<compile_context>
chip_gen: v6e
topology: v6e:2x2x1
jax: 0.10.0
libtpu: 0.0.40
codegen_flags: <defaults>
</compile_context>

<pallas_src>
import functools

import jax
import jax.numpy as jnp
from jax.experimental import pallas as pl
from jax.experimental.pallas import tpu as pltpu

D_IN = 28 * 28          # 784
H1 = 128
H2 = 64
D_OUT = 10
D_OUT_PAD = 128         # lane-dense output width (sliced back to 10 in wrapper)
SUBLANE = 8


def _round_up(x, m):
    return ((x + m - 1) // m) * m


def _cdiv(a, b):
    return -(-a // b)


def mlp_kernel(x_ref, w1_ref, b1_ref, w2_ref, b2_ref, w3_ref, b3_ref, o_ref):
    # Fused 3-layer MLP on one batch tile. Weights/biases are VMEM-resident
    # across the whole grid (constant index_maps); x/out tiles are pipelined.
    x = x_ref[...].astype(jnp.bfloat16)              # (TB, 784) f32 -> bf16 (VPU, hidden under MXU)
    h1 = jnp.dot(x, w1_ref[...], preferred_element_type=jnp.float32) + b1_ref[...]
    h1 = jnp.maximum(h1, 0.0)                        # ReLU, f32
    h2 = jnp.dot(h1.astype(jnp.bfloat16), w2_ref[...],
                 preferred_element_type=jnp.float32) + b2_ref[...]
    h2 = jnp.maximum(h2, 0.0)                        # ReLU, f32
    out = jnp.dot(h2.astype(jnp.bfloat16), w3_ref[...],
                  preferred_element_type=jnp.float32) + b3_ref[...]
    o_ref[...] = out.astype(o_ref.dtype)             # (TB, 128) bf16 full-lane store


@functools.partial(jax.jit, static_argnames=("block_b",))
def digit_classifier_forward(x, kernel_params, block_b=1024):
    """x: (B, 784) f32 (or bf16). kernel_params: padded/bf16 params from prepare_params."""
    w1, b1, w2, b2, w3, b3 = kernel_params
    B = x.shape[0]

    # Divisor-aware batch tile:
    #   * waste bounded to <8 zero rows per tile (no round_up(B, block_b) blowups),
    #   * >= 2 grid steps when the batch allows (keeps both v7x TensorCores busy),
    #   * tb is a multiple of the 8-row sublane group.
    b8 = _round_up(B, SUBLANE)
    min_tiles = 2 if b8 >= 2 * SUBLANE else 1
    n_tiles = max(_cdiv(b8, block_b), min_tiles)
    tb = _round_up(_cdiv(b8, n_tiles), SUBLANE)
    b_pad = _round_up(b8, tb)

    xp = x
    if b_pad != B:
        xp = jnp.pad(x, ((0, b_pad - B), (0, 0)))
    grid = (b_pad // tb,)

    def resident(a):  # full array, same block every grid step -> fetched once
        return pl.BlockSpec(a.shape, lambda i: (0,) * a.ndim)

    out = pl.pallas_call(
        mlp_kernel,
        out_shape=jax.ShapeDtypeStruct((b_pad, D_OUT_PAD), jnp.bfloat16),
        grid=grid,
        in_specs=[
            # Full 784-wide rows (equal to the array dim, so legal despite 784 % 128 != 0);
            # read f32 straight from HBM, cast in-kernel.
            pl.BlockSpec((tb, D_IN), lambda i: (i, 0)),
            resident(w1), resident(b1),
            resident(w2), resident(b2),
            resident(w3), resident(b3),
        ],
        out_specs=pl.BlockSpec((tb, D_OUT_PAD), lambda i: (i, 0)),
        compiler_params=pltpu.CompilerParams(
            dimension_semantics=("parallel",)),   # 2-TC sharding on v7x
    )(xp, w1, b1, w2, b2, w3, b3)

    # Slice away batch/lane padding; return f32 logits like the PyTorch module.
    return out[:B, :D_OUT].astype(jnp.float32)


def init_params(key):
    # Mirrors torch.nn.Linear default init: U(-1/sqrt(fan_in), +1/sqrt(fan_in)).
    # Weights stored as (in, out) so the kernel computes x @ W.
    def linear(key, fan_in, fan_out):
        kw, kb = jax.random.split(key)
        bound = 1.0 / (fan_in ** 0.5)
        w = jax.random.uniform(kw, (fan_in, fan_out), jnp.float32, -bound, bound)
        b = jax.random.uniform(kb, (1, fan_out), jnp.float32, -bound, bound)
        return w, b

    k1, k2, k3 = jax.random.split(key, 3)
    w1, b1 = linear(k1, D_IN, H1)
    w2, b2 = linear(k2, H1, H2)
    w3, b3 = linear(k3, H2, D_OUT)
    return (w1, b1, w2, b2, w3, b3)


def prepare_params(params):
    """Cast weights to bf16 (biases stay f32); pad layer-3 outputs 10 -> 128 for
    lane-dense stores. No K padding: x is consumed at its natural 784 width."""
    w1, b1, w2, b2, w3, b3 = params
    w3p = jnp.zeros((H2, D_OUT_PAD), jnp.float32).at[:, :D_OUT].set(w3)
    b3p = jnp.zeros((1, D_OUT_PAD), jnp.float32).at[:, :D_OUT].set(b3)
    return (w1.astype(jnp.bfloat16), b1,
            w2.astype(jnp.bfloat16), b2,
            w3p.astype(jnp.bfloat16), b3p)


def reference_forward_bf16(x, params):
    # JAX reference with the same precision recipe as the kernel
    # (bf16 matmul inputs, f32 accumulation, f32 biases).
    w1, b1, w2, b2, w3, b3 = params
    bf = jnp.bfloat16
    h1 = jnp.maximum(
        jnp.dot(x.astype(bf), w1.astype(bf), preferred_element_type=jnp.float32) + b1, 0.0)
    h2 = jnp.maximum(
        jnp.dot(h1.astype(bf), w2.astype(bf), preferred_element_type=jnp.float32) + b2, 0.0)
    return jnp.dot(h2.astype(bf), w3.astype(bf), preferred_element_type=jnp.float32) + b3


def reference_forward_f32(x, params):
    # Pure f32 reference == the original PyTorch forward pass.
    w1, b1, w2, b2, w3, b3 = params
    h1 = jnp.maximum(jnp.dot(x, w1) + b1, 0.0)
    h2 = jnp.maximum(jnp.dot(h1, w2) + b2, 0.0)
    return jnp.dot(h2, w3) + b3


if __name__ == "__main__":
    key = jax.random.PRNGKey(0)
    kx, kp = jax.random.split(key)

    params = init_params(kp)
    kernel_params = prepare_params(params)

    # Case 1: small batch, single grid step. Case 2: grid > 1, non-multiple-of-8
    # batch exercising batch padding and the multi-tile "parallel" path.
    for B, blk in ((8, 1024), (100, 64)):
        x = jax.random.normal(jax.random.fold_in(kx, B), (B, D_IN), jnp.float32)
        out = jax.block_until_ready(
            digit_classifier_forward(x, kernel_params, block_b=blk))
        assert out.shape == (B, D_OUT)

        ref_bf = reference_forward_bf16(x, params)
        err_bf = float(jnp.max(jnp.abs(out - ref_bf)))
        assert jnp.allclose(out, ref_bf, atol=2e-2, rtol=2e-2), (
            f"B={B}: mismatch vs bf16-recipe reference (max abs err {err_bf})")

        ref_f32 = reference_forward_f32(x, params)
        err_f32 = float(jnp.max(jnp.abs(out - ref_f32)))
        assert jnp.allclose(out, ref_f32, atol=5e-2, rtol=5e-2), (
            f"B={B}: mismatch vs f32 PyTorch-equivalent reference (max abs err {err_f32})")

    print("KERNEL_OK")
</pallas_src>

<mosaic_0001>
module attributes {stable_mosaic.version = 11 : i64} {
  func.func @mlp_kernel(%arg0: i32, %arg1: memref<8x784xf32, #tpu.memory_space<vmem>>, %arg2: memref<784x128xbf16, #tpu.memory_space<vmem>>, %arg3: memref<1x128xf32, #tpu.memory_space<vmem>>, %arg4: memref<128x64xbf16, #tpu.memory_space<vmem>>, %arg5: memref<1x64xf32, #tpu.memory_space<vmem>>, %arg6: memref<64x128xbf16, #tpu.memory_space<vmem>>, %arg7: memref<1x128xf32, #tpu.memory_space<vmem>>, %arg8: memref<8x128xbf16, #tpu.memory_space<vmem>>) attributes {dimension_semantics = [#tpu.dimension_semantics<parallel>], iteration_bounds = array<i64: 1>, scalar_prefetch = 0 : i64, scratch_operands = 0 : i64, tpu.core_type = #tpu.core_type<tc>, window_params = [{transform_indices = @transform_0, window_bounds = array<i64: 8, 784>}, {pipeline_mode = #tpu.pipeline_mode<synchronous>, transform_indices = @transform_1, window_bounds = array<i64: 784, 128>}, {pipeline_mode = #tpu.pipeline_mode<synchronous>, transform_indices = @transform_2, window_bounds = array<i64: 1, 128>}, {pipeline_mode = #tpu.pipeline_mode<synchronous>, transform_indices = @transform_3, window_bounds = array<i64: 128, 64>}, {pipeline_mode = #tpu.pipeline_mode<synchronous>, transform_indices = @transform_4, window_bounds = array<i64: 1, 64>}, {pipeline_mode = #tpu.pipeline_mode<synchronous>, transform_indices = @transform_5, window_bounds = array<i64: 64, 128>}, {pipeline_mode = #tpu.pipeline_mode<synchronous>, transform_indices = @transform_6, window_bounds = array<i64: 1, 128>}, {transform_indices = @transform_7, window_bounds = array<i64: 8, 128>}]} {
    %c0 = arith.constant 0 : index
    %c0_0 = arith.constant 0 : index
    %0 = vector.load %arg1[%c0, %c0_0] : memref<8x784xf32, #tpu.memory_space<vmem>>, vector<8x784xf32>
    %1 = arith.truncf %0 : vector<8x784xf32> to vector<8x784xbf16>
    %c0_1 = arith.constant 0 : index
    %c0_2 = arith.constant 0 : index
    %2 = vector.load %arg2[%c0_1, %c0_2] : memref<784x128xbf16, #tpu.memory_space<vmem>>, vector<784x128xbf16>
    %cst = arith.constant dense<0.000000e+00> : vector<8x128xf32>
    %3 = tpu.matmul %1, %2, %cst {dimension_numbers = #tpu.dot_dimension_numbers<[1], [0], [0], [1], [0, 0, 1, 1], [], []>} : vector<8x784xbf16>, vector<784x128xbf16>, vector<8x128xf32> -> vector<8x128xf32>
    %c0_3 = arith.constant 0 : index
    %c0_4 = arith.constant 0 : index
    %4 = vector.load %arg3[%c0_3, %c0_4] : memref<1x128xf32, #tpu.memory_space<vmem>>, vector<1x128xf32>
    %5 = vector.broadcast %4 : vector<1x128xf32> to vector<8x128xf32>
    %6 = arith.addf %3, %5 : vector<8x128xf32>
    %cst_5 = arith.constant 0.000000e+00 : f32
    %7 = vector.broadcast %cst_5 : f32 to vector<8x128xf32>
    %8 = arith.maximumf %6, %7 : vector<8x128xf32>
    %9 = arith.truncf %8 : vector<8x128xf32> to vector<8x128xbf16>
    %c0_6 = arith.constant 0 : index
    %c0_7 = arith.constant 0 : index
    %10 = vector.load %arg4[%c0_6, %c0_7] : memref<128x64xbf16, #tpu.memory_space<vmem>>, vector<128x64xbf16>
    %cst_8 = arith.constant dense<0.000000e+00> : vector<8x64xf32>
    %11 = tpu.matmul %9, %10, %cst_8 {dimension_numbers = #tpu.dot_dimension_numbers<[1], [0], [0], [1], [0, 0, 1, 1], [], []>} : vector<8x128xbf16>, vector<128x64xbf16>, vector<8x64xf32> -> vector<8x64xf32>
    %c0_9 = arith.constant 0 : index
    %c0_10 = arith.constant 0 : index
    %12 = vector.load %arg5[%c0_9, %c0_10] : memref<1x64xf32, #tpu.memory_space<vmem>>, vector<1x64xf32>
    %13 = vector.broadcast %12 : vector<1x64xf32> to vector<8x64xf32>
    %14 = arith.addf %11, %13 : vector<8x64xf32>
    %cst_11 = arith.constant 0.000000e+00 : f32
    %15 = vector.broadcast %cst_11 : f32 to vector<8x64xf32>
    %16 = arith.maximumf %14, %15 : vector<8x64xf32>
    %17 = arith.truncf %16 : vector<8x64xf32> to vector<8x64xbf16>
    %c0_12 = arith.constant 0 : index
    %c0_13 = arith.constant 0 : index
    %18 = vector.load %arg6[%c0_12, %c0_13] : memref<64x128xbf16, #tpu.memory_space<vmem>>, vector<64x128xbf16>
    %cst_14 = arith.constant dense<0.000000e+00> : vector<8x128xf32>
    %19 = tpu.matmul %17, %18, %cst_14 {dimension_numbers = #tpu.dot_dimension_numbers<[1], [0], [0], [1], [0, 0, 1, 1], [], []>} : vector<8x64xbf16>, vector<64x128xbf16>, vector<8x128xf32> -> vector<8x128xf32>
    %c0_15 = arith.constant 0 : index
    %c0_16 = arith.constant 0 : index
    %20 = vector.load %arg7[%c0_15, %c0_16] : memref<1x128xf32, #tpu.memory_space<vmem>>, vector<1x128xf32>
    %21 = vector.broadcast %20 : vector<1x128xf32> to vector<8x128xf32>
    %22 = arith.addf %19, %21 : vector<8x128xf32>
    %23 = arith.truncf %22 : vector<8x128xf32> to vector<8x128xbf16>
    %c0_17 = arith.constant 0 : index
    %c0_18 = arith.constant 0 : index
    %24 = vector.load %arg8[%c0_17, %c0_18] : memref<8x128xbf16, #tpu.memory_space<vmem>>, vector<8x128xbf16>
    tpu.vector_store %arg8[%c0_17, %c0_18], %23 {strides = array<i32>} : memref<8x128xbf16, #tpu.memory_space<vmem>>, vector<8x128xbf16>,
    return
  }
  func.func @transform_0(%arg0: i32) -> (i32, i32) {
    %c0_i32 = arith.constant 0 : i32
    %c0_i32_0 = arith.constant 0 : i32
    return %arg0, %c0_i32 : i32, i32
  }
  func.func @transform_1(%arg0: i32) -> (i32, i32) {
    %c0_i32 = arith.constant 0 : i32
    %c0_i32_0 = arith.constant 0 : i32
    %c0_i32_1 = arith.constant 0 : i32
    return %c0_i32, %c0_i32_0 : i32, i32
  }
  func.func @transform_2(%arg0: i32) -> (i32, i32) {
    %c0_i32 = arith.constant 0 : i32
    %c0_i32_0 = arith.constant 0 : i32
    %c0_i32_1 = arith.constant 0 : i32
    return %c0_i32, %c0_i32_0 : i32, i32
  }
  func.func @transform_3(%arg0: i32) -> (i32, i32) {
    %c0_i32 = arith.constant 0 : i32
    %c0_i32_0 = arith.constant 0 : i32
    %c0_i32_1 = arith.constant 0 : i32
    return %c0_i32, %c0_i32_0 : i32, i32
  }
  func.func @transform_4(%arg0: i32) -> (i32, i32) {
    %c0_i32 = arith.constant 0 : i32
    %c0_i32_0 = arith.constant 0 : i32
    %c0_i32_1 = arith.constant 0 : i32
    return %c0_i32, %c0_i32_0 : i32, i32
  }
  func.func @transform_5(%arg0: i32) -> (i32, i32) {
    %c0_i32 = arith.constant 0 : i32
    %c0_i32_0 = arith.constant 0 : i32
    %c0_i32_1 = arith.constant 0 : i32
    return %c0_i32, %c0_i32_0 : i32, i32
  }
  func.func @transform_6(%arg0: i32) -> (i32, i32) {
    %c0_i32 = arith.constant 0 : i32
    %c0_i32_0 = arith.constant 0 : i32
    %c0_i32_1 = arith.constant 0 : i32
    return %c0_i32, %c0_i32_0 : i32, i32
  }
  func.func @transform_7(%arg0: i32) -> (i32, i32) {
    %c0_i32 = arith.constant 0 : i32
    %c0_i32_0 = arith.constant 0 : i32
    return %arg0, %c0_i32 : i32, i32
  }
}

</mosaic_0001>

<llo_original>
// kernel: digit_classifier_forward.1
$region0: #{digit_classifier_forward.1}
  #allocation0 [shape = 'u32[]', space=smem, size = 0x4, offset = 0x4, fixed_abs, tag = 'smem constant byte address 0x4 - core index']
  #allocation1 [shape = 'u32[144,128]{1,0:T(1,128)}', space=vmem, size = 0x12000, scoped, tag = 'internal scratch']
  %s0 = inlined_call_operand.vmem [shape: f32[8,784], index: 0, kind: input, shape index: {}]
  %s1 = inlined_call_operand.hbm [shape: bf16[784,128], index: 1, kind: input, shape index: {}]
  %s2 = inlined_call_operand.vmem [shape: f32[1,128], index: 2, kind: input, shape index: {}]
  %s3 = inlined_call_operand.vmem [shape: bf16[128,64], index: 3, kind: input, shape index: {}]
  %s4 = inlined_call_operand.vmem [shape: f32[1,64], index: 4, kind: input, shape index: {}]
  %s5 = inlined_call_operand.vmem [shape: bf16[64,128], index: 5, kind: input, shape index: {}]
  %s6 = inlined_call_operand.vmem [shape: f32[1,128], index: 6, kind: input, shape index: {}]
  %s7 = inlined_call_operand.vmem [shape: bf16[8,128], index: 7, kind: output, shape index: {}]
  %s8 = sld [smem:[#allocation0]]
  $region42: #{digit_classifier_forward.1} parent=0
    _
  %s10 = ssub.s32 1, %s8
  %s11 = scalar_select 0, %s10, %s8
  $region1: #{digit_classifier_forward.1} parent=0
    #allocation2 [shape = 'u8[200704]{0}', space=vmem, size = 0x31000, scoped, tag = 'input window, operand 1, single buffered']
    #allocation3 [shape = 's32[1]{0}', space=sflag, size = 0x4, scoped, tag = 'scoped memory for digit_classifier_forward.1']
    %12 = vsyncpa [#allocation3], 0
    // Predicated region
    $region2: #{digit_classifier_forward.1} parent=1 // pred_check
      _
    $region3: #{digit_classifier_forward.1} parent=1 // pred_check_branch
      %14 = sbr.rel (0) target = $region5
    $region4: #{digit_classifier_forward.1} parent=1 // pred_region
      _
    $region5: #{digit_classifier_forward.1} parent=1 // pred_fallthru
      _
    // Predicated region
    $region6: #{digit_classifier_forward.1} parent=1 // pred_check
      _
    $region7: #{digit_classifier_forward.1} parent=1 // pred_check_branch
      %16 = sbr.rel (0) target = $region9
    $region8: #{digit_classifier_forward.1} parent=1 // pred_region
      %s18 = ssub.s32 6272, 6272
      %19 = vsyncadd [#allocation3], %s18
      %s20 = sshll.u32 [#allocation2], 4
      %s21 = int_to_ptr.vmem [resolvable:$true] %s20
      %26 = dma.hbm_to_vmem [thread:$0]  %s1, 6272, %s21, [#allocation3], 64, 64, 4
    $region9: #{digit_classifier_forward.1} parent=1 // pred_fallthru
      _
    // Predicated region
    $region10: #{digit_classifier_forward.1} parent=1 // pred_check
      _
    $region11: #{digit_classifier_forward.1} parent=1 // pred_check_branch
      %28 = sbr.rel (0) target = $region13
    $region12: #{digit_classifier_forward.1} parent=1 // pred_region
      _
    $region13: #{digit_classifier_forward.1} parent=1 // pred_fallthru
      _
    // Predicated region
    $region14: #{digit_classifier_forward.1} parent=1 // pred_check
      _
    $region15: #{digit_classifier_forward.1} parent=1 // pred_check_branch
      %30 = sbr.rel (0) target = $region17
    $region16: #{digit_classifier_forward.1} parent=1 // pred_region
      _
    $region17: #{digit_classifier_forward.1} parent=1 // pred_fallthru
      _
    // Predicated region
    $region18: #{digit_classifier_forward.1} parent=1 // pred_check
      _
    $region19: #{digit_classifier_forward.1} parent=1 // pred_check_branch
      %32 = sbr.rel (0) target = $region21
    $region20: #{digit_classifier_forward.1} parent=1 // pred_region
      _
    $region21: #{digit_classifier_forward.1} parent=1 // pred_fallthru
      _
    // Predicated region
    $region22: #{digit_classifier_forward.1} parent=1 // pred_check
      _
    $region23: #{digit_classifier_forward.1} parent=1 // pred_check_branch
      %34 = sbr.rel (0) target = $region25
    $region24: #{digit_classifier_forward.1} parent=1 // pred_region
      _
    $region25: #{digit_classifier_forward.1} parent=1 // pred_fallthru
      _
    // Predicated region
    $region26: #{digit_classifier_forward.1} parent=1 // pred_check
      _
    $region27: #{digit_classifier_forward.1} parent=1 // pred_check_branch
      %36 = sbr.rel (0) target = $region29
    $region28: #{digit_classifier_forward.1} parent=1 // pred_region
      _
    $region29: #{digit_classifier_forward.1} parent=1 // pred_fallthru
      _
    // Predicated region
    $region30: #{digit_classifier_forward.1} parent=1 // pred_check
      _
    $region31: #{digit_classifier_forward.1} parent=1 // pred_check_branch
      %38 = sbr.rel (0) target = $region33
    $region32: #{digit_classifier_forward.1} parent=1 // pred_region
      %39 = dma.done [#allocation3], 6272
    $region33: #{digit_classifier_forward.1} parent=1 // pred_fallthru
      _
    %v41 = vld [vmem:[%s0] sm:$0xff]
    %v42 = vld [vmem:[%s0 + $0x8] sm:$0xff]
    %v43 = vld [vmem:[%s0 + $0x10] sm:$0xff]
    %v44 = vld [vmem:[%s0 + $0x18] sm:$0xff]
    %v45 = vld [vmem:[%s0 + $0x20] sm:$0xff]
    %v46 = vld [vmem:[%s0 + $0x28] sm:$0xff]
    %v47 = vld [vmem:[%s0 + $0x30] sm:$0xff]
    %v48 = vpack.c.bf16 %v41, %v41
    %v49 = vpack.c.bf16 %v42, %v42
    %v50 = vpack.c.bf16 %v43, %v43
    %v51 = vpack.c.bf16 %v44, %v44
    %v52 = vpack.c.bf16 %v45, %v45
    %v53 = vpack.c.bf16 %v46, %v46
    %v54 = vpack.c.bf16 %v47, %v47
    %v55 = vld [vmem:[#allocation2] sm:$0xf]
    %v56 = vld [vmem:[#allocation2 + $0x4] sm:$0xf]
    %v57 = vld [vmem:[#allocation2 + $0x8] sm:$0xf]
    %v58 = vld [vmem:[#allocation2 + $0xc] sm:$0xf]
    %v59 = vld [vmem:[#allocation2 + $0x10] sm:$0xf]
    %v60 = vld [vmem:[#allocation2 + $0x14] sm:$0xf]
    %v61 = vld [vmem:[#allocation2 + $0x18] sm:$0xf]
    %v62 = vld [vmem:[#allocation2 + $0x1c] sm:$0xf]
    %v63 = vld [vmem:[#allocation2 + $0x20] sm:$0xf]
    %v64 = vld [vmem:[#allocation2 + $0x24] sm:$0xf]
    %v65 = vld [vmem:[#allocation2 + $0x28] sm:$0xf]
    %v66 = vld [vmem:[#allocation2 + $0x2c] sm:$0xf]
    %v67 = vld [vmem:[#allocation2 + $0x30] sm:$0xf]
    %v68 = vld [vmem:[#allocation2 + $0x34] sm:$0xf]
    %v69 = vld [vmem:[#allocation2 + $0x38] sm:$0xf]
    %v70 = vld [vmem:[#allocation2 + $0x3c] sm:$0xf]
    %v71 = vld [vmem:[#allocation2 + $0x40] sm:$0xf]
    %v72 = vld [vmem:[#allocation2 + $0x44] sm:$0xf]
    %v73 = vld [vmem:[#allocation2 + $0x48] sm:$0xf]
    %v74 = vld [vmem:[#allocation2 + $0x4c] sm:$0xf]
    %v75 = vld [vmem:[#allocation2 + $0x50] sm:$0xf]
    %v76 = vld [vmem:[#allocation2 + $0x54] sm:$0xf]
    %v77 = vld [vmem:[#allocation2 + $0x58] sm:$0xf]
    %v78 = vld [vmem:[#allocation2 + $0x5c] sm:$0xf]
    %v79 = vld [vmem:[#allocation2 + $0x60] sm:$0xf]
    %v80 = vld [vmem:[#allocation2 + $0x64] sm:$0xf]
    %v81 = vld [vmem:[#allocation2 + $0x68] sm:$0xf]
    %v82 = vld [vmem:[#allocation2 + $0x6c] sm:$0xf]
    %v83 = vld [vmem:[#allocation2 + $0x70] sm:$0xf]
    %v84 = vld [vmem:[#allocation2 + $0x74] sm:$0xf]
    %v85 = vld [vmem:[#allocation2 + $0x78] sm:$0xf]
    %v86 = vld [vmem:[#allocation2 + $0x7c] sm:$0xf]
    %v87 = vld [vmem:[#allocation2 + $0x80] sm:$0xf]
    %v88 = vld [vmem:[#allocation2 + $0x84] sm:$0xf]
    %v89 = vld [vmem:[#allocation2 + $0x88] sm:$0xf]
    %v90 = vld [vmem:[#allocation2 + $0x8c] sm:$0xf]
    %v91 = vld [vmem:[#allocation2 + $0x90] sm:$0xf]
    %v92 = vld [vmem:[#allocation2 + $0x94] sm:$0xf]
    %v93 = vld [vmem:[#allocation2 + $0x98] sm:$0xf]
    %v94 = vld [vmem:[#allocation2 + $0x9c] sm:$0xf]
    %v95 = vld [vmem:[#allocation2 + $0xa0] sm:$0xf]
    %v96 = vld [vmem:[#allocation2 + $0xa4] sm:$0xf]
    %v97 = vld [vmem:[#allocation2 + $0xa8] sm:$0xf]
    %v98 = vld [vmem:[#allocation2 + $0xac] sm:$0xf]
    %v99 = vld [vmem:[#allocation2 + $0xb0] sm:$0xf]
    %v100 = vld [vmem:[#allocation2 + $0xb4] sm:$0xf]
    %v101 = vld [vmem:[#allocation2 + $0xb8] sm:$0xf]
    %v102 = vld [vmem:[#allocation2 + $0xbc] sm:$0xf]
    %v103 = vld [vmem:[#allocation2 + $0xc0] sm:$0xf]
    %v104 = vld [vmem:[#allocation2 + $0xc4] sm:$0xf]
    %v105 = vld [vmem:[#allocation2 + $0xc8] sm:$0xf]
    %v106 = vld [vmem:[#allocation2 + $0xcc] sm:$0xf]
    %v107 = vld [vmem:[#allocation2 + $0xd0] sm:$0xf]
    %v108 = vld [vmem:[#allocation2 + $0xd4] sm:$0xf]
    %v109 = vld [vmem:[#allocation2 + $0xd8] sm:$0xf]
    %v110 = vld [vmem:[#allocation2 + $0xdc] sm:$0xf]
    %v111 = vld [vmem:[#allocation2 + $0xe0] sm:$0xf]
    %v112 = vld [vmem:[#allocation2 + $0xe4] sm:$0xf]
    %v113 = vld [vmem:[#allocation2 + $0xe8] sm:$0xf]
    %v114 = vld [vmem:[#allocation2 + $0xec] sm:$0xf]
    %v115 = vld [vmem:[#allocation2 + $0xf0] sm:$0xf]
    %v116 = vld [vmem:[#allocation2 + $0xf4] sm:$0xf]
    %v117 = vld [vmem:[#allocation2 + $0xf8] sm:$0xf]
    %v118 = vld [vmem:[#allocation2 + $0xfc] sm:$0xf]
    %v119 = vld [vmem:[#allocation2 + $0x100] sm:$0xf]
    %v120 = vld [vmem:[#allocation2 + $0x104] sm:$0xf]
    %v121 = vld [vmem:[#allocation2 + $0x108] sm:$0xf]
    %v122 = vld [vmem:[#allocation2 + $0x10c] sm:$0xf]
    %v123 = vld [vmem:[#allocation2 + $0x110] sm:$0xf]
    %v124 = vld [vmem:[#allocation2 + $0x114] sm:$0xf]
    %v125 = vld [vmem:[#allocation2 + $0x118] sm:$0xf]
    %v126 = vld [vmem:[#allocation2 + $0x11c] sm:$0xf]
    %v127 = vld [vmem:[#allocation2 + $0x120] sm:$0xf]
    %v128 = vld [vmem:[#allocation2 + $0x124] sm:$0xf]
    %v129 = vld [vmem:[#allocation2 + $0x128] sm:$0xf]
    %v130 = vld [vmem:[#allocation2 + $0x12c] sm:$0xf]
    %v131 = vld [vmem:[#allocation2 + $0x130] sm:$0xf]
    %v132 = vld [vmem:[#allocation2 + $0x134] sm:$0xf]
    %v133 = vld [vmem:[#allocation2 + $0x138] sm:$0xf]
    %v134 = vld [vmem:[#allocation2 + $0x13c] sm:$0xf]
    %v135 = vld [vmem:[#allocation2 + $0x140] sm:$0xf]
    %v136 = vld [vmem:[#allocation2 + $0x144] sm:$0xf]
    %v137 = vld [vmem:[#allocation2 + $0x148] sm:$0xf]
    %v138 = vld [vmem:[#allocation2 + $0x14c] sm:$0xf]
    %v139 = vld [vmem:[#allocation2 + $0x150] sm:$0xf]
    %v140 = vld [vmem:[#allocation2 + $0x154] sm:$0xf]
    %v141 = vld [vmem:[#allocation2 + $0x158] sm:$0xf]
    %v142 = vld [vmem:[#allocation2 + $0x15c] sm:$0xf]
    %v143 = vld [vmem:[#allocation2 + $0x160] sm:$0xf]
    %v144 = vld [vmem:[#allocation2 + $0x164] sm:$0xf]
    %v145 = vld [vmem:[#allocation2 + $0x168] sm:$0xf]
    %v146 = vld [vmem:[#allocation2 + $0x16c] sm:$0xf]
    %v147 = vld [vmem:[#allocation2 + $0x170] sm:$0xf]
    %v148 = vld [vmem:[#allocation2 + $0x174] sm:$0xf]
    %v149 = vld [vmem:[#allocation2 + $0x178] sm:$0xf]
    %v150 = vld [vmem:[#allocation2 + $0x17c] sm:$0xf]
    %v151 = vld [vmem:[#allocation2 + $0x180] sm:$0xf]
    %v152 = vld [vmem:[#allocation2 + $0x184] sm:$0xf]
    %v153 = vld [vmem:[%s2] sm:$0x1]
    %v155 = vlaneseq
    %v156 = vshrl.u32 %v155, 7
    %v157 = vsub.s32 0, %v156
    %v158 = vrot.slane %v153, %v157
    %v258 = vunpack.c.l.b16 %v55
    %v259 = vunpack.c.l.b16 %v56
    %v260 = vunpack.c.l.b16 %v57
    %v261 = vunpack.c.l.b16 %v58
    %v262 = vunpack.c.l.b16 %v59
    %v263 = vunpack.c.l.b16 %v60
    %v264 = vunpack.c.l.b16 %v61
    %v265 = vunpack.c.l.b16 %v62
    %v266 = vunpack.c.l.b16 %v63
    %v267 = vunpack.c.l.b16 %v64
    %v268 = vunpack.c.l.b16 %v65
    %v269 = vunpack.c.l.b16 %v66
    %v270 = vunpack.c.l.b16 %v67
    %v271 = vunpack.c.l.b16 %v68
    %v272 = vunpack.c.l.b16 %v69
    %v273 = vunpack.c.l.b16 %v70
    %v274 = vunpack.c.l.b16 %v71
    %v275 = vunpack.c.l.b16 %v72
    %v276 = vunpack.c.l.b16 %v73
    %v277 = vunpack.c.l.b16 %v74
    %v278 = vunpack.c.l.b16 %v75
    %v279 = vunpack.c.l.b16 %v76
    %v280 = vunpack.c.l.b16 %v77
    %v281 = vunpack.c.l.b16 %v78
    %v282 = vunpack.c.l.b16 %v79
    %v283 = vunpack.c.l.b16 %v80
    %v284 = vunpack.c.l.b16 %v81
    %v285 = vunpack.c.l.b16 %v82
    %v286 = vunpack.c.l.b16 %v83
    %v287 = vunpack.c.l.b16 %v84
    %v288 = vunpack.c.l.b16 %v85
    %v289 = vunpack.c.l.b16 %v86
    %v290 = vunpack.c.l.b16 %v87
    %v291 = vunpack.c.l.b16 %v88
    %v292 = vunpack.c.l.b16 %v89
    %v293 = vunpack.c.l.b16 %v90
    %v294 = vunpack.c.l.b16 %v91
    %v295 = vunpack.c.l.b16 %v92
    %v296 = vunpack.c.l.b16 %v93
    %v297 = vunpack.c.l.b16 %v94
    %v298 = vunpack.c.l.b16 %v95
    %v299 = vunpack.c.l.b16 %v96
    %v300 = vunpack.c.l.b16 %v97
    %v301 = vunpack.c.l.b16 %v98
    %v302 = vunpack.c.l.b16 %v99
    %v303 = vunpack.c.l.b16 %v100
    %v304 = vunpack.c.l.b16 %v101
    %v305 = vunpack.c.l.b16 %v102
    %v306 = vunpack.c.l.b16 %v103
    %v307 = vunpack.c.l.b16 %v104
    %v308 = vunpack.c.l.b16 %v105
    %v309 = vunpack.c.l.b16 %v106
    %v310 = vunpack.c.l.b16 %v107
    %v311 = vunpack.c.l.b16 %v108
    %v312 = vunpack.c.l.b16 %v109
    %v313 = vunpack.c.l.b16 %v110
    %v314 = vunpack.c.l.b16 %v111
    %v315 = vunpack.c.l.b16 %v112
    %v316 = vunpack.c.l.b16 %v113
    %v317 = vunpack.c.l.b16 %v114
    %v318 = vunpack.c.l.b16 %v115
    %v319 = vunpack.c.l.b16 %v116
    %v320 = vunpack.c.l.b16 %v117
    %v321 = vunpack.c.l.b16 %v118
    %v322 = vunpack.c.l.b16 %v119
    %v323 = vunpack.c.l.b16 %v120
    %v324 = vunpack.c.l.b16 %v121
    %v325 = vunpack.c.l.b16 %v122
    %v326 = vunpack.c.l.b16 %v123
    %v327 = vunpack.c.l.b16 %v124
    %v328 = vunpack.c.l.b16 %v125
    %v329 = vunpack.c.l.b16 %v126
    %v330 = vunpack.c.l.b16 %v127
    %v331 = vunpack.c.l.b16 %v128
    %v332 = vunpack.c.l.b16 %v129
    %v333 = vunpack.c.l.b16 %v130
    %v334 = vunpack.c.l.b16 %v131
    %v335 = vunpack.c.l.b16 %v132
    %v336 = vunpack.c.l.b16 %v133
    %v337 = vunpack.c.l.b16 %v134
    %v338 = vunpack.c.l.b16 %v135
    %v339 = vunpack.c.l.b16 %v136
    %v340 = vunpack.c.l.b16 %v137
    %v341 = vunpack.c.l.b16 %v138
    %v342 = vunpack.c.l.b16 %v139
    %v343 = vunpack.c.l.b16 %v140
    %v344 = vunpack.c.l.b16 %v141
    %v345 = vunpack.c.l.b16 %v142
    %v346 = vunpack.c.l.b16 %v143
    %v347 = vunpack.c.l.b16 %v144
    %v348 = vunpack.c.l.b16 %v145
    %v349 = vunpack.c.l.b16 %v146
    %v350 = vunpack.c.l.b16 %v147
    %v351 = vunpack.c.l.b16 %v148
    %v352 = vunpack.c.l.b16 %v149
    %v353 = vunpack.c.l.b16 %v150
    %v354 = vunpack.c.l.b16 %v151
    %v355 = vunpack.c.l.b16 %v152
    %v356 = vpack.c.b16 %v259, %v258
    %v357 = vpack.c.b16 %v261, %v260
    %v358 = vpack.c.b16 %v263, %v262
    %v359 = vpack.c.b16 %v265, %v264
    %v360 = vpack.c.b16 %v267, %v266
    %v361 = vpack.c.b16 %v269, %v268
    %v362 = vpack.c.b16 %v271, %v270
    %v363 = vpack.c.b16 %v273, %v272
    %v364 = vpack.c.b16 %v275, %v274
    %v365 = vpack.c.b16 %v277, %v276
    %v366 = vpack.c.b16 %v279, %v278
    %v367 = vpack.c.b16 %v281, %v280
    %v368 = vpack.c.b16 %v283, %v282
    %v369 = vpack.c.b16 %v285, %v284
    %v370 = vpack.c.b16 %v287, %v286
    %v371 = vpack.c.b16 %v289, %v288
    %v372 = vpack.c.b16 %v291, %v290
    %v373 = vpack.c.b16 %v293, %v292
    %v374 = vpack.c.b16 %v295, %v294
    %v375 = vpack.c.b16 %v297, %v296
    %v376 = vpack.c.b16 %v299, %v298
    %v377 = vpack.c.b16 %v301, %v300
    %v378 = vpack.c.b16 %v303, %v302
    %v379 = vpack.c.b16 %v305, %v304
    %v380 = vpack.c.b16 %v307, %v306
    %v381 = vpack.c.b16 %v309, %v308
    %v382 = vpack.c.b16 %v311, %v310
    %v383 = vpack.c.b16 %v313, %v312
    %v384 = vpack.c.b16 %v315, %v314
    %v385 = vpack.c.b16 %v317, %v316
    %v386 = vpack.c.b16 %v319, %v318
    %v387 = vpack.c.b16 %v321, %v320
    %v388 = vpack.c.b16 %v323, %v322
    %v389 = vpack.c.b16 %v325, %v324
    %v390 = vpack.c.b16 %v327, %v326
    %v391 = vpack.c.b16 %v329, %v328
    %v392 = vpack.c.b16 %v331, %v330
    %v393 = vpack.c.b16 %v333, %v332
    %v394 = vpack.c.b16 %v335, %v334
    %v395 = vpack.c.b16 %v337, %v336
    %v396 = vpack.c.b16 %v339, %v338
    %v397 = vpack.c.b16 %v341, %v340
    %v398 = vpack.c.b16 %v343, %v342
    %v399 = vpack.c.b16 %v345, %v344
    %v400 = vpack.c.b16 %v347, %v346
    %v401 = vpack.c.b16 %v349, %v348
    %v402 = vpack.c.b16 %v351, %v350
    %v403 = vpack.c.b16 %v353, %v352
    %v404 = vpack.c.b16 %v355, %v354
    %vm454 = vcmask 130048
    %v456 = vsel %vm454, %v54, 0
    %458 = vmatprep.subr.bf16.mxu0 0
    %459 = vmatpush1.bf16.msra.mxu0 %v363
    %460 = vmatprep.subr.bf16.mxu0 0
    %461 = vmatpush1.bf16.msra.mxu0 %v362
    %462 = vmatprep.subr.bf16.mxu0 0
    %463 = vmatpush1.bf16.msra.mxu0 %v361
    %464 = vmatprep.subr.bf16.mxu0 0
    %465 = vmatpush1.bf16.msra.mxu0 %v360
    %466 = vmatprep.subr.bf16.mxu0 0
    %467 = vmatpush1.bf16.msra.mxu0 %v359
    %468 = vmatprep.subr.bf16.mxu0 0
    %469 = vmatpush1.bf16.msra.mxu0 %v358
    %470 = vmatprep.subr.bf16.mxu0 0
    %471 = vmatpush1.bf16.msra.mxu0 %v357
    %472 = vmatprep.subr.bf16.mxu0 0
    %473 = vmatpush1.bf16.msra.mxu0 %v356
    %474 = vmatprep.subr.bf16.mxu0 0
    %475 = vmatpush2.bf16.msra.mxu0 %v371
    %476 = vmatprep.subr.bf16.mxu0 0
    %477 = vmatpush2.bf16.msra.mxu0 %v370
    %478 = vmatprep.subr.bf16.mxu0 0
    %479 = vmatpush2.bf16.msra.mxu0 %v369
    %480 = vmatprep.subr.bf16.mxu0 0
    %481 = vmatpush2.bf16.msra.mxu0 %v368
    %482 = vmatprep.subr.bf16.mxu0 0
    %483 = vmatpush2.bf16.msra.mxu0 %v367
    %484 = vmatprep.subr.bf16.mxu0 0
    %485 = vmatpush2.bf16.msra.mxu0 %v366
    %486 = vmatprep.subr.bf16.mxu0 0
    %487 = vmatpush2.bf16.msra.mxu0 %v365
    %488 = vmatprep.subr.bf16.mxu0 0
    %489 = vmatpush2.bf16.msra.mxu0 %v364
    %490 = vmatprep.mubr.bf16.mxu0 %v49
    %491 = vmatmul.mubr.bf16.gmra.mxu0 %v48
    %v492 = vpop.f32.mrf.mxu0
    %v493 = vadd.f32 %v158, %v492
    %v494 = vpop.f32.mrf.mxu0
    %v495 = vpop.f32.mrf.mxu0
    %v496 = vpop.f32.mrf.mxu0
    %497 = vdwg.mxu0
    %498 = vmatprep.subr.bf16.mxu0 0
    %499 = vmatpush1.bf16.msra.mxu0 %v379
    %500 = vmatprep.subr.bf16.mxu0 0
    %501 = vmatpush1.bf16.msra.mxu0 %v378
    %502 = vmatprep.subr.bf16.mxu0 0
    %503 = vmatpush1.bf16.msra.mxu0 %v377
    %504 = vmatprep.subr.bf16.mxu0 0
    %505 = vmatpush1.bf16.msra.mxu0 %v376
    %506 = vmatprep.subr.bf16.mxu0 0
    %507 = vmatpush1.bf16.msra.mxu0 %v375
    %508 = vmatprep.subr.bf16.mxu0 0
    %509 = vmatpush1.bf16.msra.mxu0 %v374
    %510 = vmatprep.subr.bf16.mxu0 0
    %511 = vmatpush1.bf16.msra.mxu0 %v373
    %512 = vmatprep.subr.bf16.mxu0 0
    %513 = vmatpush1.bf16.msra.mxu0 %v372
    %514 = vmatprep.subr.bf16.mxu0 0
    %515 = vmatpush2.bf16.msra.mxu0 %v387
    %516 = vmatprep.subr.bf16.mxu0 0
    %517 = vmatpush2.bf16.msra.mxu0 %v386
    %518 = vmatprep.subr.bf16.mxu0 0
    %519 = vmatpush2.bf16.msra.mxu0 %v385
    %520 = vmatprep.subr.bf16.mxu0 0
    %521 = vmatpush2.bf16.msra.mxu0 %v384
    %522 = vmatprep.subr.bf16.mxu0 0
    %523 = vmatpush2.bf16.msra.mxu0 %v383
    %524 = vmatprep.subr.bf16.mxu0 0
    %525 = vmatpush2.bf16.msra.mxu0 %v382
    %526 = vmatprep.subr.bf16.mxu0 0
    %527 = vmatpush2.bf16.msra.mxu0 %v381
    %528 = vmatprep.subr.bf16.mxu0 0
    %529 = vmatpush2.bf16.msra.mxu0 %v380
    %530 = vmatprep.mubr.bf16.mxu0 %v51
    %531 = vmatmul.mubr.bf16.gmra.mxu0 %v50
    %v532 = vpop.f32.mrf.mxu0
    %v533 = vadd.f32 %v493, %v532
    %v534 = vpop.f32.mrf.mxu0
    %v535 = vpop.f32.mrf.mxu0
    %v536 = vpop.f32.mrf.mxu0
    %537 = vdwg.mxu0
    %538 = vmatprep.subr.bf16.mxu0 0
    %539 = vmatpush1.bf16.msra.mxu0 %v395
    %540 = vmatprep.subr.bf16.mxu0 0
    %541 = vmatpush1.bf16.msra.mxu0 %v394
    %542 = vmatprep.subr.bf16.mxu0 0
    %543 = vmatpush1.bf16.msra.mxu0 %v393
    %544 = vmatprep.subr.bf16.mxu0 0
    %545 = vmatpush1.bf16.msra.mxu0 %v392
    %546 = vmatprep.subr.bf16.mxu0 0
    %547 = vmatpush1.bf16.msra.mxu0 %v391
    %548 = vmatprep.subr.bf16.mxu0 0
    %549 = vmatpush1.bf16.msra.mxu0 %v390
    %550 = vmatprep.subr.bf16.mxu0 0
    %551 = vmatpush1.bf16.msra.mxu0 %v389
    %552 = vmatprep.subr.bf16.mxu0 0
    %553 = vmatpush1.bf16.msra.mxu0 %v388
    %554 = vmatprep.subr.bf16.mxu0 0
    %555 = vmatpush2.bf16.msra.mxu0 %v403
    %556 = vmatprep.subr.bf16.mxu0 0
    %557 = vmatpush2.bf16.msra.mxu0 %v402
    %558 = vmatprep.subr.bf16.mxu0 0
    %559 = vmatpush2.bf16.msra.mxu0 %v401
    %560 = vmatprep.subr.bf16.mxu0 0
    %561 = vmatpush2.bf16.msra.mxu0 %v400
    %562 = vmatprep.subr.bf16.mxu0 0
    %563 = vmatpush2.bf16.msra.mxu0 %v399
    %564 = vmatprep.subr.bf16.mxu0 0
    %565 = vmatpush2.bf16.msra.mxu0 %v398
    %566 = vmatprep.subr.bf16.mxu0 0
    %567 = vmatpush2.bf16.msra.mxu0 %v397
    %568 = vmatprep.subr.bf16.mxu0 0
    %569 = vmatpush2.bf16.msra.mxu0 %v396
    %570 = vmatprep.mubr.bf16.mxu0 %v53
    %571 = vmatmul.mubr.bf16.gmra.mxu0 %v52
    %v572 = vpop.f32.mrf.mxu0
    %v573 = vadd.f32 %v533, %v572
    %v574 = vpop.f32.mrf.mxu0
    %v575 = vpop.f32.mrf.mxu0
    %v576 = vpop.f32.mrf.mxu0
    %577 = vdwg.mxu0
    %578 = vmatprep.subr.bf16.mxu0 0
    %579 = vmatpush1.bf16.msra.mxu0 0
    %580 = vmatprep.subr.bf16.mxu0 0
    %581 = vmatpush1.bf16.msra.mxu0 0
    %582 = vmatprep.subr.bf16.mxu0 0
    %583 = vmatpush1.bf16.msra.mxu0 0
    %584 = vmatprep.subr.bf16.mxu0 0
    %585 = vmatpush1.bf16.msra.mxu0 0
    %586 = vmatprep.subr.bf16.mxu0 0
    %587 = vmatpush1.bf16.msra.mxu0 0
    %588 = vmatprep.subr.bf16.mxu0 0
    %589 = vmatpush1.bf16.msra.mxu0 0
    %590 = vmatprep.subr.bf16.mxu0 0
    %591 = vmatpush1.bf16.msra.mxu0 0
    %592 = vmatprep.subr.bf16.mxu0 0
    %593 = vmatpush1.bf16.msra.mxu0 %v404
    %594 = vmatprep.subr.bf16.mxu0 0
    %595 = vmatpush2.bf16.msra.mxu0 0
    %596 = vmatprep.subr.bf16.mxu0 0
    %597 = vmatpush2.bf16.msra.mxu0 0
    %598 = vmatprep.subr.bf16.mxu0 0
    %599 = vmatpush2.bf16.msra.mxu0 0
    %600 = vmatprep.subr.bf16.mxu0 0
    %601 = vmatpush2.bf16.msra.mxu0 0
    %602 = vmatprep.subr.bf16.mxu0 0
    %603 = vmatpush2.bf16.msra.mxu0 0
    %604 = vmatprep.subr.bf16.mxu0 0
    %605 = vmatpush2.bf16.msra.mxu0 0
    %606 = vmatprep.subr.bf16.mxu0 0
    %607 = vmatpush2.bf16.msra.mxu0 0
    %608 = vmatprep.subr.bf16.mxu0 0
    %609 = vmatpush2.bf16.msra.mxu0 0
    %610 = vmatprep.mubr.bf16.mxu0 0
    %611 = vmatmul.mubr.bf16.gmra.mxu0 %v456
    %v612 = vpop.f32.mrf.mxu0
    %v613 = vadd.f32 %v573, %v612
    %v614 = vpop.f32.mrf.mxu0
    %v615 = vpop.f32.mrf.mxu0
    %v616 = vpop.f32.mrf.mxu0
    %617 = vdwg.mxu0
    %v618 = vmax.f32 %v613, 0.0
    %v619 = vpack.c.bf16 %v618, %v618
    %v620 = vld [vmem:[%s3] sm:$0xf]
    %v621 = vld [vmem:[%s3 + $0x4] sm:$0xf]
    %v622 = vld [vmem:[%s3 + $0x8] sm:$0xf]
    %v623 = vld [vmem:[%s3 + $0xc] sm:$0xf]
    %v624 = vld [vmem:[%s3 + $0x10] sm:$0xf]
    %v625 = vld [vmem:[%s3 + $0x14] sm:$0xf]
    %v626 = vld [vmem:[%s3 + $0x18] sm:$0xf]
    %v627 = vld [vmem:[%s3 + $0x1c] sm:$0xf]
    %v628 = vld [vmem:[%s3 + $0x20] sm:$0xf]
    %v629 = vld [vmem:[%s3 + $0x24] sm:$0xf]
    %v630 = vld [vmem:[%s3 + $0x28] sm:$0xf]
    %v631 = vld [vmem:[%s3 + $0x2c] sm:$0xf]
    %v632 = vld [vmem:[%s3 + $0x30] sm:$0xf]
    %v633 = vld [vmem:[%s3 + $0x34] sm:$0xf]
    %v634 = vld [vmem:[%s3 + $0x38] sm:$0xf]
    %v635 = vld [vmem:[%s3 + $0x3c] sm:$0xf]
    %v636 = vld [vmem:[%s4] sm:$0x1]
    %v638 = vlaneseq
    %v639 = vshrl.u32 %v638, 7
    %v640 = vsub.s32 0, %v639
    %v641 = vrot.slane %v636, %v640
    %v659 = vunpack.c.l.b16 %v620
    %v660 = vunpack.c.l.b16 %v621
    %v661 = vunpack.c.l.b16 %v622
    %v662 = vunpack.c.l.b16 %v623
    %v663 = vunpack.c.l.b16 %v624
    %v664 = vunpack.c.l.b16 %v625
    %v665 = vunpack.c.l.b16 %v626
    %v666 = vunpack.c.l.b16 %v627
    %v667 = vunpack.c.l.b16 %v628
    %v668 = vunpack.c.l.b16 %v629
    %v669 = vunpack.c.l.b16 %v630
    %v670 = vunpack.c.l.b16 %v631
    %v671 = vunpack.c.l.b16 %v632
    %v672 = vunpack.c.l.b16 %v633
    %v673 = vunpack.c.l.b16 %v634
    %v674 = vunpack.c.l.b16 %v635
    %v675 = vpack.c.b16 %v660, %v659
    %v676 = vpack.c.b16 %v662, %v661
    %v677 = vpack.c.b16 %v664, %v663
    %v678 = vpack.c.b16 %v666, %v665
    %v679 = vpack.c.b16 %v668, %v667
    %v680 = vpack.c.b16 %v670, %v669
    %v681 = vpack.c.b16 %v672, %v671
    %v682 = vpack.c.b16 %v674, %v673
    %691 = vmatprep.subr.bf16.mxu0 0
    %692 = vmatpush1.bf16.msra.mxu0 %v682
    %693 = vmatprep.subr.bf16.mxu0 0
    %694 = vmatpush1.bf16.msra.mxu0 %v681
    %695 = vmatprep.subr.bf16.mxu0 0
    %696 = vmatpush1.bf16.msra.mxu0 %v680
    %697 = vmatprep.subr.bf16.mxu0 0
    %698 = vmatpush1.bf16.msra.mxu0 %v679
    %699 = vmatprep.subr.bf16.mxu0 0
    %700 = vmatpush1.bf16.msra.mxu0 %v678
    %701 = vmatprep.subr.bf16.mxu0 0
    %702 = vmatpush1.bf16.msra.mxu0 %v677
    %703 = vmatprep.subr.bf16.mxu0 0
    %704 = vmatpush1.bf16.msra.mxu0 %v676
    %705 = vmatprep.subr.bf16.mxu0 0
    %706 = vmatpush1.bf16.msra.mxu0 %v675
    %707 = vmatprep.subr.bf16.mxu0 0
    %708 = vmatpush2.bf16.msra.mxu0 0
    %709 = vmatprep.subr.bf16.mxu0 0
    %710 = vmatpush2.bf16.msra.mxu0 0
    %711 = vmatprep.subr.bf16.mxu0 0
    %712 = vmatpush2.bf16.msra.mxu0 0
    %713 = vmatprep.subr.bf16.mxu0 0
    %714 = vmatpush2.bf16.msra.mxu0 0
    %715 = vmatprep.subr.bf16.mxu0 0
    %716 = vmatpush2.bf16.msra.mxu0 0
    %717 = vmatprep.subr.bf16.mxu0 0
    %718 = vmatpush2.bf16.msra.mxu0 0
    %719 = vmatprep.subr.bf16.mxu0 0
    %720 = vmatpush2.bf16.msra.mxu0 0
    %721 = vmatprep.subr.bf16.mxu0 0
    %722 = vmatpush2.bf16.msra.mxu0 0
    %723 = vmatprep.mubr.bf16.mxu0 0
    %724 = vmatmul.mubr.bf16.gmra.mxu0 %v619
    %v725 = vpop.f32.mrf.mxu0
    %v726 = vadd.f32 %v641, %v725
    %v727 = vpop.f32.mrf.mxu0
    %v728 = vpop.f32.mrf.mxu0
    %v729 = vpop.f32.mrf.mxu0
    %730 = vdwg.mxu0
    %v731 = vmax.f32 %v726, 0.0
    %v732 = vpack.c.bf16 %v731, %v731
    %v733 = vld [vmem:[%s5] sm:$0xf]
    %v734 = vld [vmem:[%s5 + $0x4] sm:$0xf]
    %v735 = vld [vmem:[%s5 + $0x8] sm:$0xf]
    %v736 = vld [vmem:[%s5 + $0xc] sm:$0xf]
    %v737 = vld [vmem:[%s5 + $0x10] sm:$0xf]
    %v738 = vld [vmem:[%s5 + $0x14] sm:$0xf]
    %v739 = vld [vmem:[%s5 + $0x18] sm:$0xf]
    %v740 = vld [vmem:[%s5 + $0x1c] sm:$0xf]
    %v741 = vld [vmem:[%s6] sm:$0x1]
    %v743 = vlaneseq
    %v744 = vshrl.u32 %v743, 7
    %v745 = vsub.s32 0, %v744
    %v746 = vrot.slane %v741, %v745
    %v756 = vunpack.c.l.b16 %v733
    %v757 = vunpack.c.l.b16 %v734
    %v758 = vunpack.c.l.b16 %v735
    %v759 = vunpack.c.l.b16 %v736
    %v760 = vunpack.c.l.b16 %v737
    %v761 = vunpack.c.l.b16 %v738
    %v762 = vunpack.c.l.b16 %v739
    %v763 = vunpack.c.l.b16 %v740
    %v764 = vpack.c.b16 %v757, %v756
    %v765 = vpack.c.b16 %v759, %v758
    %v766 = vpack.c.b16 %v761, %v760
    %v767 = vpack.c.b16 %v763, %v762
    %vm772 = vcmask 523264
    %v774 = vsel %vm772, %v732, 0
    %776 = vmatprep.subr.bf16.mxu0 0
    %777 = vmatpush1.bf16.msra.mxu0 0
    %778 = vmatprep.subr.bf16.mxu0 0
    %779 = vmatpush1.bf16.msra.mxu0 0
    %780 = vmatprep.subr.bf16.mxu0 0
    %781 = vmatpush1.bf16.msra.mxu0 0
    %782 = vmatprep.subr.bf16.mxu0 0
    %783 = vmatpush1.bf16.msra.mxu0 0
    %784 = vmatprep.subr.bf16.mxu0 0
    %785 = vmatpush1.bf16.msra.mxu0 %v767
    %786 = vmatprep.subr.bf16.mxu0 0
    %787 = vmatpush1.bf16.msra.mxu0 %v766
    %788 = vmatprep.subr.bf16.mxu0 0
    %789 = vmatpush1.bf16.msra.mxu0 %v765
    %790 = vmatprep.subr.bf16.mxu0 0
    %791 = vmatpush1.bf16.msra.mxu0 %v764
    %792 = vmatprep.subr.bf16.mxu0 0
    %793 = vmatpush2.bf16.msra.mxu0 0
    %794 = vmatprep.subr.bf16.mxu0 0
    %795 = vmatpush2.bf16.msra.mxu0 0
    %796 = vmatprep.subr.bf16.mxu0 0
    %797 = vmatpush2.bf16.msra.mxu0 0
    %798 = vmatprep.subr.bf16.mxu0 0
    %799 = vmatpush2.bf16.msra.mxu0 0
    %800 = vmatprep.subr.bf16.mxu0 0
    %801 = vmatpush2.bf16.msra.mxu0 0
    %802 = vmatprep.subr.bf16.mxu0 0
    %803 = vmatpush2.bf16.msra.mxu0 0
    %804 = vmatprep.subr.bf16.mxu0 0
    %805 = vmatpush2.bf16.msra.mxu0 0
    %806 = vmatprep.subr.bf16.mxu0 0
    %807 = vmatpush2.bf16.msra.mxu0 0
    %808 = vmatprep.mubr.bf16.mxu0 0
    %809 = vmatmul.mubr.bf16.gmra.mxu0 %v774
    %v810 = vpop.f32.mrf.mxu0
    %v811 = vadd.f32 %v746, %v810
    %v812 = vpop.f32.mrf.mxu0
    %v813 = vpop.f32.mrf.mxu0
    %v814 = vpop.f32.mrf.mxu0
    %815 = vdwg.mxu0
    %v816 = vpack.c.bf16 %v811, %v811
    %817 = vst [vmem:[%s7] sm:$0xf] %v816
    // Predicated region
    $region34: #{digit_classifier_forward.1} parent=1 // pred_check
      _
    $region35: #{digit_classifier_forward.1} parent=1 // pred_check_branch
      %819 = sbr.rel (0) target = $region37
    $region36: #{digit_classifier_forward.1} parent=1 // pred_region
      _
    $region37: #{digit_classifier_forward.1} parent=1 // pred_fallthru
      _
    // Predicated region
    $region38: #{digit_classifier_forward.1} parent=1 // pred_check
      _
    $region39: #{digit_classifier_forward.1} parent=1 // pred_check_branch
      %821 = sbr.rel (0) target = $region41
    $region40: #{digit_classifier_forward.1} parent=1 // pred_region
      _
    $region41: #{digit_classifier_forward.1} parent=1 // pred_fallthru
      _
    %822 = vsyncpa [#allocation3], 1

</llo_original>
